<compile_context>
chip_gen: v5e
topology: v5e:2x2
jax: 0.10.0
libtpu: 0.0.40
codegen_flags: <defaults>
</compile_context>

<pallas_src>
import functools
import math

import jax
import jax.numpy as jnp
from jax.experimental import pallas as pl
from jax.experimental.pallas import tpu as pltpu


def _round_up(x, k):
    return ((x + k - 1) // k) * k


def _sublane_multiple(dtype):
    # packed-sublane tiling: f32 -> 8, bf16 -> 16, int8/fp8 -> 32
    return {4: 8, 2: 16, 1: 32}[jnp.dtype(dtype).itemsize]


def _maxnorm_scale(sumsq, max_norm):
    # torch.embedding_renorm_: rows with ||row|| > max_norm are scaled by
    # max_norm / (||row|| + 1e-7).
    norm = jnp.sqrt(sumsq)
    return jnp.where(norm > max_norm, max_norm / (norm + 1e-7), 1.0)


# ---------------------------------------------------------------------------
# Path 1: small table resident in VMEM, gather via one-hot matmul on the MXU.
# ---------------------------------------------------------------------------
def _embed_table_kernel(idx_ref, w_ref, out_ref, *, max_norm):
    # idx_ref: (tile_n, 1) int32 token ids (VMEM block)
    # w_ref:   (V, D) weight table (same VMEM block every grid step)
    # out_ref: (tile_n, D)
    tile_n = idx_ref.shape[0]
    V = w_ref.shape[0]
    ids = idx_ref[...]                                               # (tile_n, 1)
    onehot = jax.lax.broadcasted_iota(jnp.int32, (tile_n, V), 1) == ids
    rows = jnp.dot(onehot.astype(w_ref.dtype), w_ref[...],
                   preferred_element_type=jnp.float32,
                   precision=jax.lax.Precision.HIGHEST)              # (tile_n, D)
    if max_norm is not None:
        sumsq = jnp.sum(rows * rows, axis=-1, keepdims=True)         # (tile_n, 1)
        rows = rows * _maxnorm_scale(sumsq, max_norm)
    # Dropout: identity (G.dropout False / eval mode).
    out_ref[...] = rows.astype(out_ref.dtype)


def _embed_small_table(idx_flat, weight, N, max_norm, tile_n):
    V, D = weight.shape
    sub = _sublane_multiple(weight.dtype)
    tile_n = max(sub, min(tile_n, _round_up(N, sub)) // sub * sub)
    n_pad = _round_up(N, tile_n)
    idx2 = jnp.pad(idx_flat, (0, n_pad - N)).reshape(n_pad, 1)
    num_tiles = n_pad // tile_n

    out = pl.pallas_call(
        functools.partial(_embed_table_kernel, max_norm=max_norm),
        out_shape=jax.ShapeDtypeStruct((n_pad, D), weight.dtype),
        grid=(num_tiles,),
        in_specs=[
            pl.BlockSpec((tile_n, 1), lambda i: (i, 0)),   # token-id tile
            pl.BlockSpec((V, D), lambda i: (0, 0)),        # whole table in VMEM
        ],
        out_specs=pl.BlockSpec((tile_n, D), lambda i: (i, 0)),
        compiler_params=pltpu.CompilerParams(
            dimension_semantics=("parallel",)),            # tiles independent
    )(idx2, weight)
    return out[:N]


# ---------------------------------------------------------------------------
# Path 2: large table in HBM, manual DMA row gather with lane packing,
# aggregate wait and cross-step double buffering.
# ---------------------------------------------------------------------------
def _embed_hbm_gather_kernel(idx_ref, w_hbm, out_ref, buf, sem, *,
                             tile_n, pack, d, max_norm):
    # idx_ref: (n_pad,) int32 in SMEM (scalar prefetch)  -- flattened token ids
    # w_hbm:   (V, D) table left in HBM (memory_space=pl.ANY)
    # out_ref: (tile_n // pack, pack * D) lane-dense output tile
    # buf:     (2, tile_n // pack, pack * D) VMEM gather double buffer
    # sem:     (2,) DMA semaphores, one per buffer slot
    i = pl.program_id(0)
    num_tiles = pl.num_programs(0)
    slot = i & 1

    def issue_tile(tile_idx, dst_slot):
        base = tile_idx * tile_n

        def body(r, carry):
            row = idx_ref[base + r]
            col = pl.multiple_of((r % pack) * d, d)
            pltpu.make_async_copy(
                w_hbm.at[pl.ds(row, 1), :],                          # (1, D) HBM
                buf.at[dst_slot, pl.ds(r // pack, 1), pl.ds(col, d)],  # (1, D) VMEM
                sem.at[dst_slot],
            ).start()
            return carry

        # Unrolled issue loop: SMEM index reads co-schedule with DMA issue.
        jax.lax.fori_loop(0, tile_n, body, 0, unroll=8)

    # Prime the pipeline on the first grid step.
    @pl.when(i == 0)
    def _():
        issue_tile(0, 0)

    # ONE aggregate wait for the whole tile (tile_n * D * itemsize bytes).
    pltpu.make_async_copy(buf.at[slot], buf.at[slot], sem.at[slot]).wait()

    # Prefetch the next tile into the other slot while we renorm/store this one.
    @pl.when(i + 1 < num_tiles)
    def _():
        issue_tile(i + 1, 1 - slot)

    rows = buf[slot].astype(jnp.float32)          # (tile_n//pack, pack*D)

    if max_norm is not None:
        if pack == 1:
            sumsq = jnp.sum(rows * rows, axis=-1, keepdims=True)
        else:
            # Block-diagonal ones: proj[l, l2] = (l // D == l2 // D); one MXU
            # matmul gives each token's sum-of-squares broadcast across its
            # own D lanes, with no lane reshapes.
            width = pack * d
            li = jax.lax.broadcasted_iota(jnp.int32, (width, width), 0) // d
            lj = jax.lax.broadcasted_iota(jnp.int32, (width, width), 1) // d
            proj = (li == lj).astype(jnp.float32)
            sumsq = jnp.dot(rows * rows, proj,
                            preferred_element_type=jnp.float32,
                            precision=jax.lax.Precision.HIGHEST)
        rows = rows * _maxnorm_scale(sumsq, max_norm)

    # Dropout: identity (G.dropout False / eval mode).
    out_ref[...] = rows.astype(out_ref.dtype)


def _embed_hbm_gather(idx_flat, weight, N, max_norm, tile_n):
    V, D = weight.shape
    itemsize = jnp.dtype(weight.dtype).itemsize
    sub = _sublane_multiple(weight.dtype)
    pack = 128 // D if (D < 128 and 128 % D == 0) else 1   # tokens per lane row
    width = pack * D
    align = sub * pack

    # Per-step VMEM ~ 2 gather slots + 2 pipelined out blocks = 4*tile_n*D*item;
    # cap at ~8 MiB so any tile_n/D combo also fits v7x's smaller VMEM.
    cap = max(align, ((8 << 20) // (4 * D * itemsize)) // align * align)
    tile_n = min(tile_n, cap, _round_up(N, align))
    tile_n = max(align, tile_n // align * align)
    n_pad = _round_up(N, tile_n)
    num_tiles = n_pad // tile_n
    rows_per_tile = tile_n // pack

    idx_pad = jnp.pad(idx_flat, (0, n_pad - N))   # pad tokens gather row 0
    # TODO(synk): for very large N, tile the index array into SMEM blocks
    # instead of scalar-prefetching it whole (1-D SMEM pads to pow2 bytes).

    out_packed = pl.pallas_call(
        functools.partial(_embed_hbm_gather_kernel, tile_n=tile_n, pack=pack,
                          d=D, max_norm=max_norm),
        out_shape=jax.ShapeDtypeStruct((n_pad // pack, width), weight.dtype),
        grid_spec=pltpu.PrefetchScalarGridSpec(
            num_scalar_prefetch=1,                          # ids -> SMEM
            grid=(num_tiles,),
            in_specs=[pl.BlockSpec(memory_space=pl.ANY)],   # table stays in HBM
            out_specs=pl.BlockSpec((rows_per_tile, width), lambda i, idx: (i, 0)),
            scratch_shapes=[
                pltpu.VMEM((2, rows_per_tile, width), weight.dtype),  # dbl buffer
                pltpu.SemaphoreType.DMA((2,)),                        # per-slot sems
            ],
        ),
        compiler_params=pltpu.CompilerParams(
            # cross-step prefetch carries state across grid iterations
            dimension_semantics=("arbitrary",)),
    )(idx_pad, weight)

    # Unfold the lane packing: (n_pad//P, P*D) row-major == (n_pad, D).
    return out_packed.reshape(n_pad, D)[:N]


# ---------------------------------------------------------------------------
# Public wrapper
# ---------------------------------------------------------------------------
def embed_forward(indices, weight, *, max_norm=1.0, tile_n=256,
                  force_hbm_gather=False):
    """Embed forward: (n, m) int ids -> (n, m, D) embeddings with max_norm."""
    in_shape = indices.shape
    V, D = weight.shape
    N = int(math.prod(in_shape))
    # PyTorch raises on out-of-range ids; clamp so a bad id can never drive an
    # out-of-bounds DMA / gather.
    idx_flat = jnp.clip(indices.reshape(N).astype(jnp.int32), 0, V - 1)

    table_bytes = V * D * jnp.dtype(weight.dtype).itemsize
    small = (not force_hbm_gather) and table_bytes <= (4 << 20) and V <= 2048

    if small:
        out_flat = _embed_small_table(idx_flat, weight, N, max_norm, tile_n)
    else:
        out_flat = _embed_hbm_gather(idx_flat, weight, N, max_norm, tile_n)
    return out_flat.reshape(*in_shape, D)


def embed_reference(indices, weight, max_norm):
    # Plain-JAX reference with torch.embedding_renorm_ semantics.
    norm = jnp.sqrt(jnp.sum(weight * weight, axis=-1, keepdims=True))
    scale = jnp.where(norm > max_norm, max_norm / (norm + 1e-7), 1.0)
    return (weight * scale)[indices]


if __name__ == "__main__":
    key = jax.random.PRNGKey(0)
    k_w1, k_i1, k_i2, k_w3, k_i3, k_w4, k_i4 = jax.random.split(key, 7)

    # Gene-like hyperparameters: G.d_embed = V, G.d_out[-1] = D, G.max_norm,
    # G.dropout = False.  nn.Embedding default init: N(0, 1).
    max_norm = 1.0

    # --- Case 1: small-table fast path (VMEM table, one-hot MXU gather),
    #     2-tile grid.
    V1, D1 = 64, 32
    w1 = jax.random.normal(k_w1, (V1, D1), dtype=jnp.float32)
    idx1 = jax.random.randint(k_i1, (2, 8), 0, V1, dtype=jnp.int32)
    out1 = jax.block_until_ready(embed_forward(idx1, w1, max_norm=max_norm, tile_n=8))
    assert out1.shape == (2, 8, D1)
    assert jnp.allclose(out1, embed_reference(idx1, w1, max_norm), atol=1e-5, rtol=1e-5)

    # --- Case 2: fast path, token count not a multiple of the tile (padding).
    idx2 = jax.random.randint(k_i2, (3, 5), 0, V1, dtype=jnp.int32)
    out2 = jax.block_until_ready(embed_forward(idx2, w1, max_norm=max_norm, tile_n=8))
    assert out2.shape == (3, 5, D1)
    assert jnp.allclose(out2, embed_reference(idx2, w1, max_norm), atol=1e-5, rtol=1e-5)

    # --- Case 3: HBM DMA-gather path: lane-packed output (D=32 -> 4 tokens per
    #     128-lane row), 3-tile grid with cross-step double buffering + padding.
    V3, D3 = 512, 32
    w3 = jax.random.normal(k_w3, (V3, D3), dtype=jnp.float32)
    idx3 = jax.random.randint(k_i3, (4, 40), 0, V3, dtype=jnp.int32)      # 160 tokens
    out3 = jax.block_until_ready(
        embed_forward(idx3, w3, max_norm=max_norm, tile_n=64, force_hbm_gather=True))
    assert out3.shape == (4, 40, D3)
    assert jnp.allclose(out3, embed_reference(idx3, w3, max_norm), atol=1e-5, rtol=1e-5)

    # --- Case 4: HBM path with D >= 128 (no packing) and a max_norm that
    #     exercises both renormed and untouched rows.
    V4, D4, mn4 = 256, 128, 11.5
    w4 = jax.random.normal(k_w4, (V4, D4), dtype=jnp.float32)
    idx4 = jax.random.randint(k_i4, (2, 20), 0, V4, dtype=jnp.int32)      # 40 tokens
    out4 = jax.block_until_ready(
        embed_forward(idx4, w4, max_norm=mn4, tile_n=32, force_hbm_gather=True))
    assert out4.shape == (2, 20, D4)
    assert jnp.allclose(out4, embed_reference(idx4, w4, mn4), atol=1e-5, rtol=1e-5)

    print("KERNEL_OK")
</pallas_src>

<mosaic_0001>
module attributes {stable_mosaic.version = 11 : i64} {
  func.func @_embed_table_kernel(%arg0: i32, %arg1: memref<8x1xi32, #tpu.memory_space<vmem>>, %arg2: memref<64x32xf32, #tpu.memory_space<vmem>>, %arg3: memref<8x32xf32, #tpu.memory_space<vmem>>) attributes {dimension_semantics = [#tpu.dimension_semantics<parallel>], iteration_bounds = array<i64: 2>, scalar_prefetch = 0 : i64, scratch_operands = 0 : i64, tpu.core_type = #tpu.core_type<tc>, window_params = [{transform_indices = @transform_0, window_bounds = array<i64: 8, 1>}, {pipeline_mode = #tpu.pipeline_mode<synchronous>, transform_indices = @transform_1, window_bounds = array<i64: 64, 32>}, {transform_indices = @transform_2, window_bounds = array<i64: 8, 32>}]} {
    %c0 = arith.constant 0 : index
    %c0_0 = arith.constant 0 : index
    %0 = vector.load %arg1[%c0, %c0_0] : memref<8x1xi32, #tpu.memory_space<vmem>>, vector<8x1xi32>
    %1 = tpu.iota {dimensions = array<i32: 1>} : vector<8x64xi32>
    %2 = vector.broadcast %0 : vector<8x1xi32> to vector<8x64xi32>
    %3 = arith.cmpi eq, %1, %2 : vector<8x64xi32>
    %4 = arith.extui %3 : vector<8x64xi1> to vector<8x64xi32>
    %5 = arith.sitofp %4 : vector<8x64xi32> to vector<8x64xf32>
    %c0_1 = arith.constant 0 : index
    %c0_2 = arith.constant 0 : index
    %6 = vector.load %arg2[%c0_1, %c0_2] : memref<64x32xf32, #tpu.memory_space<vmem>>, vector<64x32xf32>
    %cst = arith.constant dense<0.000000e+00> : vector<8x32xf32>
    %7 = tpu.matmul %5, %6, %cst {dimension_numbers = #tpu.dot_dimension_numbers<[1], [0], [0], [1], [0, 0, 1, 1], [], []>, precision = #tpu.contract_precision<fp32>} : vector<8x64xf32>, vector<64x32xf32>, vector<8x32xf32> -> vector<8x32xf32>
    %8 = arith.mulf %7, %7 : vector<8x32xf32>
    %cst_3 = arith.constant dense<0.000000e+00> : vector<8xf32>
    %9 = vector.multi_reduction <add>, %8, %cst_3 [1] : vector<8x32xf32> to vector<8xf32>
    %10 = vector.shape_cast %9 : vector<8xf32> to vector<8x1xf32>
    %11 = math.sqrt %10 : vector<8x1xf32>
    %cst_4 = arith.constant 1.000000e+00 : f32
    %12 = vector.broadcast %cst_4 : f32 to vector<8x1xf32>
    %13 = arith.cmpf ogt, %11, %12 : vector<8x1xf32>
    %cst_5 = arith.constant 1.000000e-07 : f32
    %14 = vector.broadcast %cst_5 : f32 to vector<8x1xf32>
    %15 = arith.addf %11, %14 : vector<8x1xf32>
    %cst_6 = arith.constant 1.000000e+00 : f32
    %16 = vector.broadcast %cst_6 : f32 to vector<8x1xf32>
    %17 = arith.divf %16, %15 : vector<8x1xf32>
    %cst_7 = arith.constant 1.000000e+00 : f32
    %18 = vector.broadcast %cst_7 : f32 to vector<8x1xf32>
    %19 = arith.select %13, %17, %18 : vector<8x1xi1>, vector<8x1xf32>
    %20 = vector.broadcast %19 : vector<8x1xf32> to vector<8x32xf32>
    %21 = arith.mulf %7, %20 : vector<8x32xf32>
    %c0_8 = arith.constant 0 : index
    %c0_9 = arith.constant 0 : index
    %22 = vector.load %arg3[%c0_8, %c0_9] : memref<8x32xf32, #tpu.memory_space<vmem>>, vector<8x32xf32>
    tpu.vector_store %arg3[%c0_8, %c0_9], %21 {strides = array<i32>} : memref<8x32xf32, #tpu.memory_space<vmem>>, vector<8x32xf32>,
    return
  }
  func.func @transform_0(%arg0: i32) -> (i32, i32) {
    %c0_i32 = arith.constant 0 : i32
    %c0_i32_0 = arith.constant 0 : i32
    return %arg0, %c0_i32 : i32, i32
  }
  func.func @transform_1(%arg0: i32) -> (i32, i32) {
    %c0_i32 = arith.constant 0 : i32
    %c0_i32_0 = arith.constant 0 : i32
    %c0_i32_1 = arith.constant 0 : i32
    return %c0_i32, %c0_i32_0 : i32, i32
  }
  func.func @transform_2(%arg0: i32) -> (i32, i32) {
    %c0_i32 = arith.constant 0 : i32
    %c0_i32_0 = arith.constant 0 : i32
    return %arg0, %c0_i32 : i32, i32
  }
}

</mosaic_0001>

<llo_original>
// kernel: tpu_custom_call.1
$region0: #{tpu_custom_call.1}
  #allocation0 [shape = 'u32[]', space=smem, size = 0x4, offset = 0x4, fixed_abs, tag = 'smem constant byte address 0x4 - core index']
  #allocation1 [shape = 'u32[72,128]{1,0:T(1,128)}', space=vmem, size = 0x9000, scoped, tag = 'internal scratch']
  %s0 = inlined_call_operand.vmem [shape: s32[16,1], index: 0, kind: input, shape index: {}]
  %s1 = inlined_call_operand.vmem [shape: f32[64,32], index: 1, kind: input, shape index: {}]
  %s2 = inlined_call_operand.hbm [shape: f32[16,32], index: 2, kind: output, shape index: {}]
  %s3 = sld [smem:[#allocation0]]
  $region41: #{tpu_custom_call.1} parent=0
    _
  %s5 = ssub.s32 1, %s3
  %s6 = scalar_select 0, %s5, %s3
  $region1: #{tpu_custom_call.1} parent=0
    #allocation2 [shape = 'u8[8192]{0}', space=vmem, size = 0x2000, scoped, tag = 'output window, operand 0']
    #allocation3 [shape = 's32[2]{0}', space=sflag, size = 0x8, scoped, tag = 'scoped memory for tpu_custom_call.1']
    %7 = vsyncpa [#allocation3], 0
    %s8 = scalar_lea.sflag [#allocation3], 1
    %9 = vsyncpa %s8, 0
    loop: start=0, step=1, limit=4
    $region2: #{tpu_custom_call.1} parent=1 // loop_pre_header
      _
    $region3: #{tpu_custom_call.1} parent=1 // loop_header
      %s11 = sphi 0, %s15
      %p12 = scmp.ge.s32.totalorder %s11, 4
      %s21 = sphi 0, %s23
      %s24 = sphi 0, %s21
      %s25 = sphi 0, %s24
      %s41 = sphi 0, %s25
      %s45 = sphi 0, %s45
      %s47 = sphi 0, %s45
      %s48 = sphi 0, %s47
      %s62 = sphi 0, %s48
      %s68 = sphi 0, %s70
      %s71 = sphi 0, %s68
      %s72 = sphi 0, %s71
      %s88 = sphi 0, %s72
    $region4: #{tpu_custom_call.1} parent=1 // loop_header_branch
      %14 = sbr.rel (%p12) target = $region8
    $region5: #{tpu_custom_call.1} parent=1 // loop_body
      %s16 = ssub.s32 %s11, 1
      %s17 = ssub.s32 %s11, 2
      %s18 = sadd.s32 %s11, 1
      %s19 = ssub.s32 %s11, %s18
      %p20 = scmp.eq.s32.totalorder %s19, 0
      %s22 = sadd.s32 %s21, 1
      %s23 = scalar_select %p20, %s21, %s22
      %p26 = pneg %p20
      %p27 = scmp.eq.s32.totalorder %s11, 1
      %p28 = por %p26, %p27
      %p29 = scmp.ne.s32.totalorder %s21, %s24
      %p30 = scmp.eq.s32.totalorder %s11, 0
      %p31 = por %p29, %p30
      %p32 = scmp.ne.s32.totalorder %s21, %s24
      %p33 = scmp.eq.s32.totalorder %s16, 1
      %p34 = por %p32, %p33
      %p35 = scmp.ne.s32.totalorder %s24, %s25
      %p36 = scmp.eq.s32.totalorder %s16, 0
      %p37 = por %p35, %p36
      %p38 = scmp.ne.s32.totalorder %s24, %s25
      %p39 = scmp.eq.s32.totalorder %s17, 1
      %p40 = por %p38, %p39
      %p42 = scmp.ne.s32.totalorder %s25, %s41
      %p43 = scmp.eq.s32.totalorder %s17, 0
      %p44 = por %p42, %p43
      %s46 = sadd.s32 %s45, 1
      %p49 = scmp.eq.s32.totalorder %s11, 1
      %p50 = scmp.ne.s32.totalorder %s45, %s47
      %p51 = scmp.eq.s32.totalorder %s11, 0
      %p52 = por %p50, %p51
      %p53 = scmp.ne.s32.totalorder %s45, %s47
      %p54 = scmp.eq.s32.totalorder %s16, 1
      %p55 = por %p53, %p54
      %p56 = scmp.ne.s32.totalorder %s47, %s48
      %p57 = scmp.eq.s32.totalorder %s16, 0
      %p58 = por %p56, %p57
      %p59 = scmp.ne.s32.totalorder %s47, %s48
      %p60 = scmp.eq.s32.totalorder %s17, 1
      %p61 = por %p59, %p60
      %p63 = scmp.ne.s32.totalorder %s48, %s62
      %p64 = scmp.eq.s32.totalorder %s17, 0
      %p65 = por %p63, %p64
      %s66 = ssub.s32 %s11, %s18
      %p67 = scmp.eq.s32.totalorder %s66, 0
      %s69 = sadd.s32 %s68, 1
      %s70 = scalar_select %p67, %s68, %s69
      %p73 = pneg %p67
      %p74 = scmp.eq.s32.totalorder %s11, 1
      %p75 = por %p73, %p74
      %p76 = scmp.ne.s32.totalorder %s68, %s71
      %p77 = scmp.eq.s32.totalorder %s11, 0
      %p78 = por %p76, %p77
      %p79 = scmp.ne.s32.totalorder %s68, %s71
      %p80 = scmp.eq.s32.totalorder %s16, 1
      %p81 = por %p79, %p80
      %p82 = scmp.ne.s32.totalorder %s71, %s72
      %p83 = scmp.eq.s32.totalorder %s16, 0
      %p84 = por %p82, %p83
      %p85 = scmp.ne.s32.totalorder %s71, %s72
      %p86 = scmp.eq.s32.totalorder %s17, 1
      %p87 = por %p85, %p86
      %p89 = scmp.ne.s32.totalorder %s72, %s88
      %p90 = scmp.eq.s32.totalorder %s17, 0
      %p91 = por %p89, %p90
      %p92 = scmp.le.s32.totalorder 1, %s11
      %p93 = scmp.lt.s32.totalorder %s11, 3
      %p94 = pnand %p92, %p93
      %p95 = pneg %p94
      // Predicated region
      $region9: #{tpu_custom_call.1} parent=5 // pred_check
        _
      $region10: #{tpu_custom_call.1} parent=5 // pred_check_branch
        %97 = sbr.rel (%p94) target = $region12
      $region11: #{tpu_custom_call.1} parent=5 // pred_region
        %s98 = ssub.s32 %s11, 1
        // Predicated region
        $region13: #{tpu_custom_call.1} parent=11 // pred_check
          %p99 = pneg %p58
        $region14: #{tpu_custom_call.1} parent=11 // pred_check_branch
          %101 = sbr.rel (%p99) target = $region16
        $region15: #{tpu_custom_call.1} parent=11 // pred_region
          _
        $region16: #{tpu_custom_call.1} parent=11 // pred_fallthru
          _
      $region12: #{tpu_custom_call.1} parent=5 // pred_fallthru
        _
      %p102 = scmp.lt.s32.totalorder %s11, 2
      // Predicated region
      $region17: #{tpu_custom_call.1} parent=5 // pred_check
        %p103 = pneg %p102
      $region18: #{tpu_custom_call.1} parent=5 // pred_check_branch
        %105 = sbr.rel (%p103) target = $region20
      $region19: #{tpu_custom_call.1} parent=5 // pred_region
        // Predicated region
        $region21: #{tpu_custom_call.1} parent=19 // pred_check
          %p106 = pneg %p31
        $region22: #{tpu_custom_call.1} parent=19 // pred_check_branch
          %108 = sbr.rel (%p106) target = $region24
        $region23: #{tpu_custom_call.1} parent=19 // pred_region
          %p109 = scmp.lt.s32.totalorder %s11, 1
          %s110 = scalar_select %p109, %s11, 1
          %s111 = smul.addr %s110, 8
          %s112 = scalar_lea.vmem %s0, %s111
        $region24: #{tpu_custom_call.1} parent=19 // pred_fallthru
          _
      $region20: #{tpu_custom_call.1} parent=5 // pred_fallthru
        _
      %p113 = scmp.le.s32.totalorder 1, %s11
      %p114 = scmp.lt.s32.totalorder %s11, 3
      %p115 = pnand %p113, %p114
      %p116 = pneg %p115
      // Predicated region
      $region25: #{tpu_custom_call.1} parent=5 // pred_check
        _
      $region26: #{tpu_custom_call.1} parent=5 // pred_check_branch
        %118 = sbr.rel (%p115) target = $region28
      $region27: #{tpu_custom_call.1} parent=5 // pred_region
        %s119 = ssub.s32 %s11, 1
        %p120 = scmp.lt.s32.totalorder %s16, 1
        %s121 = scalar_select %p120, %s16, 1
        %s122 = smul.addr %s121, 8
        %s123 = scalar_lea.vmem %s0, %s122
        %p124 = pneg %p37
        %p125 = pneg %p34
        %p126 = pneg %p58
        %p127 = pneg %p55
        %p128 = pneg %p84
        %p129 = pneg %p81
        %s130 = sand.u32 %s71, 1
        %s131 = scalar_lea.sflag [#allocation3], %s130
        %s132 = sand.u32 %s71, 1
        %s133 = smul.addr %s132, 8
        %s134 = scalar_lea.vmem [#allocation2], %s133
        %p135 = scmp.lt.s32.totalorder %s16, 1
        %s136 = scalar_select %p135, %s16, 1
        %s137 = smul.addr %s136, 8
        %s138 = scalar_lea.vmem %s0, %s137
        %v139 = vld [vmem:[%s138] sm:$0xff]
        %v140 = vlaneseq
        %v141 = vand.u32 %v140, 127
        %142 = vset.pattern.permute.xlu0 0
        %143 = vperm.xlu0 %142, %v139
        %v144 = vpop.permute.xlu0 %143
        %vm145 = vcmp.eq.s32.totalorder %v141, %v144
        %v146 = vsel %vm145, 1, 0
        %v147 = vcvt.s32.f32 %v146
        %v148 = vld [vmem:[%s1] sm:$0xff]
        %v149 = vld [vmem:[%s1 + $0x8] sm:$0xff]
        %v150 = vld [vmem:[%s1 + $0x10] sm:$0xff]
        %v151 = vld [vmem:[%s1 + $0x18] sm:$0xff]
        %v152 = vld [vmem:[%s1 + $0x20] sm:$0xff]
        %v153 = vld [vmem:[%s1 + $0x28] sm:$0xff]
        %v154 = vld [vmem:[%s1 + $0x30] sm:$0xff]
        %v155 = vld [vmem:[%s1 + $0x38] sm:$0xff]
        %vm156 = vcmask 523264
        %v158 = vsel %vm156, %v147, 0
        %160 = vmatpush.msra.mxu0 0.0
        %161 = vmatpush.msra.mxu0 0.0
        %162 = vmatpush.msra.mxu0 0.0
        %163 = vmatpush.msra.mxu0 0.0
        %164 = vmatpush.msra.mxu0 0.0
        %165 = vmatpush.msra.mxu0 0.0
        %166 = vmatpush.msra.mxu0 0.0
        %167 = vmatpush.msra.mxu0 0.0
        %v168 = vand.u32 %v155, 4294901760
        %169 = vmatpush.msra.mxu0 %v168
        %v170 = vand.u32 %v154, 4294901760
        %171 = vmatpush.msra.mxu0 %v170
        %v172 = vand.u32 %v153, 4294901760
        %173 = vmatpush.msra.mxu0 %v172
        %v174 = vand.u32 %v152, 4294901760
        %175 = vmatpush.msra.mxu0 %v174
        %v176 = vand.u32 %v151, 4294901760
        %177 = vmatpush.msra.mxu0 %v176
        %v178 = vand.u32 %v150, 4294901760
        %179 = vmatpush.msra.mxu0 %v178
        %v180 = vand.u32 %v149, 4294901760
        %181 = vmatpush.msra.mxu0 %v180
        %v182 = vand.u32 %v148, 4294901760
        %183 = vmatpush.msra.mxu0 %v182
        %v184 = vand.u32 %v158, 4294901760
        %v185 = vsub.f32 %v158, %v184
        %v186 = vand.u32 %v185, 4294901760
        %v187 = vsub.f32 %v185, %v186
        %v188 = vand.u32 %v187, 4294901760
        %189 = vmatmul.f32.gmra.mxu0 %v188
        %v190 = vpop.f32.mrf.mxu0
        %v191 = vadd.f32 0.0, %v190
        %192 = vdwg.mxu0
        %193 = vmatpush.msra.mxu0 0.0
        %194 = vmatpush.msra.mxu0 0.0
        %195 = vmatpush.msra.mxu0 0.0
        %196 = vmatpush.msra.mxu0 0.0
        %197 = vmatpush.msra.mxu0 0.0
        %198 = vmatpush.msra.mxu0 0.0
        %199 = vmatpush.msra.mxu0 0.0
        %200 = vmatpush.msra.mxu0 0.0
        %v201 = vand.u32 %v155, 4294901760
        %v202 = vsub.f32 %v155, %v201
        %v203 = vand.u32 %v202, 4294901760
        %v204 = vsub.f32 %v202, %v203
        %v205 = vand.u32 %v204, 4294901760
        %206 = vmatpush.msra.mxu0 %v205
        %v207 = vand.u32 %v154, 4294901760
        %v208 = vsub.f32 %v154, %v207
        %v209 = vand.u32 %v208, 4294901760
        %v210 = vsub.f32 %v208, %v209
        %v211 = vand.u32 %v210, 4294901760
        %212 = vmatpush.msra.mxu0 %v211
        %v213 = vand.u32 %v153, 4294901760
        %v214 = vsub.f32 %v153, %v213
        %v215 = vand.u32 %v214, 4294901760
        %v216 = vsub.f32 %v214, %v215
        %v217 = vand.u32 %v216, 4294901760
        %218 = vmatpush.msra.mxu0 %v217
        %v219 = vand.u32 %v152, 4294901760
        %v220 = vsub.f32 %v152, %v219
        %v221 = vand.u32 %v220, 4294901760
        %v222 = vsub.f32 %v220, %v221
        %v223 = vand.u32 %v222, 4294901760
        %224 = vmatpush.msra.mxu0 %v223
        %v225 = vand.u32 %v151, 4294901760
        %v226 = vsub.f32 %v151, %v225
        %v227 = vand.u32 %v226, 4294901760
        %v228 = vsub.f32 %v226, %v227
        %v229 = vand.u32 %v228, 4294901760
        %230 = vmatpush.msra.mxu0 %v229
        %v231 = vand.u32 %v150, 4294901760
        %v232 = vsub.f32 %v150, %v231
        %v233 = vand.u32 %v232, 4294901760
        %v234 = vsub.f32 %v232, %v233
        %v235 = vand.u32 %v234, 4294901760
        %236 = vmatpush.msra.mxu0 %v235
        %v237 = vand.u32 %v149, 4294901760
        %v238 = vsub.f32 %v149, %v237
        %v239 = vand.u32 %v238, 4294901760
        %v240 = vsub.f32 %v238, %v239
        %v241 = vand.u32 %v240, 4294901760
        %242 = vmatpush.msra.mxu0 %v241
        %v243 = vand.u32 %v148, 4294901760
        %v244 = vsub.f32 %v148, %v243
        %v245 = vand.u32 %v244, 4294901760
        %v246 = vsub.f32 %v244, %v245
        %v247 = vand.u32 %v246, 4294901760
        %248 = vmatpush.msra.mxu0 %v247
        %v249 = vand.u32 %v158, 4294901760
        %250 = vmatmul.f32.gmra.mxu0 %v249
        %v251 = vpop.f32.mrf.mxu0
        %v252 = vadd.f32 %v191, %v251
        %253 = vdwg.mxu0
        %254 = vmatpush.msra.mxu0 0.0
        %255 = vmatpush.msra.mxu0 0.0
        %256 = vmatpush.msra.mxu0 0.0
        %257 = vmatpush.msra.mxu0 0.0
        %258 = vmatpush.msra.mxu0 0.0
        %259 = vmatpush.msra.mxu0 0.0
        %260 = vmatpush.msra.mxu0 0.0
        %261 = vmatpush.msra.mxu0 0.0
        %v262 = vand.u32 %v155, 4294901760
        %v263 = vsub.f32 %v155, %v262
        %264 = vmatpush.msra.mxu0 %v263
        %v265 = vand.u32 %v154, 4294901760
        %v266 = vsub.f32 %v154, %v265
        %267 = vmatpush.msra.mxu0 %v266
        %v268 = vand.u32 %v153, 4294901760
        %v269 = vsub.f32 %v153, %v268
        %270 = vmatpush.msra.mxu0 %v269
        %v271 = vand.u32 %v152, 4294901760
        %v272 = vsub.f32 %v152, %v271
        %273 = vmatpush.msra.mxu0 %v272
        %v274 = vand.u32 %v151, 4294901760
        %v275 = vsub.f32 %v151, %v274
        %276 = vmatpush.msra.mxu0 %v275
        %v277 = vand.u32 %v150, 4294901760
        %v278 = vsub.f32 %v150, %v277
        %279 = vmatpush.msra.mxu0 %v278
        %v280 = vand.u32 %v149, 4294901760
        %v281 = vsub.f32 %v149, %v280
        %282 = vmatpush.msra.mxu0 %v281
        %v283 = vand.u32 %v148, 4294901760
        %v284 = vsub.f32 %v148, %v283
        %285 = vmatpush.msra.mxu0 %v284
        %v286 = vand.u32 %v158, 4294901760
        %v287 = vsub.f32 %v158, %v286
        %288 = vmatmul.f32.gmra.mxu0 %v287
        %v289 = vpop.f32.mrf.mxu0
        %v290 = vadd.f32 %v252, %v289
        %291 = vdwg.mxu0
        %292 = vmatpush.msra.mxu0 0.0
        %293 = vmatpush.msra.mxu0 0.0
        %294 = vmatpush.msra.mxu0 0.0
        %295 = vmatpush.msra.mxu0 0.0
        %296 = vmatpush.msra.mxu0 0.0
        %297 = vmatpush.msra.mxu0 0.0
        %298 = vmatpush.msra.mxu0 0.0
        %299 = vmatpush.msra.mxu0 0.0
        %v300 = vand.u32 %v155, 4294901760
        %301 = vmatpush.msra.mxu0 %v300
        %v302 = vand.u32 %v154, 4294901760
        %303 = vmatpush.msra.mxu0 %v302
        %v304 = vand.u32 %v153, 4294901760
        %305 = vmatpush.msra.mxu0 %v304
        %v306 = vand.u32 %v152, 4294901760
        %307 = vmatpush.msra.mxu0 %v306
        %v308 = vand.u32 %v151, 4294901760
        %309 = vmatpush.msra.mxu0 %v308
        %v310 = vand.u32 %v150, 4294901760
        %311 = vmatpush.msra.mxu0 %v310
        %v312 = vand.u32 %v149, 4294901760
        %313 = vmatpush.msra.mxu0 %v312
        %v314 = vand.u32 %v148, 4294901760
        %315 = vmatpush.msra.mxu0 %v314
        %v316 = vand.u32 %v158, 4294901760
        %v317 = vsub.f32 %v158, %v316
        %v318 = vand.u32 %v317, 4294901760
        %319 = vmatmul.f32.gmra.mxu0 %v318
        %v320 = vpop.f32.mrf.mxu0
        %v321 = vadd.f32 %v290, %v320
        %322 = vdwg.mxu0
        %323 = vmatpush.msra.mxu0 0.0
        %324 = vmatpush.msra.mxu0 0.0
        %325 = vmatpush.msra.mxu0 0.0
        %326 = vmatpush.msra.mxu0 0.0
        %327 = vmatpush.msra.mxu0 0.0
        %328 = vmatpush.msra.mxu0 0.0
        %329 = vmatpush.msra.mxu0 0.0
        %330 = vmatpush.msra.mxu0 0.0
        %v331 = vand.u32 %v155, 4294901760
        %v332 = vsub.f32 %v155, %v331
        %v333 = vand.u32 %v332, 4294901760
        %334 = vmatpush.msra.mxu0 %v333
        %v335 = vand.u32 %v154, 4294901760
        %v336 = vsub.f32 %v154, %v335
        %v337 = vand.u32 %v336, 4294901760
        %338 = vmatpush.msra.mxu0 %v337
        %v339 = vand.u32 %v153, 4294901760
        %v340 = vsub.f32 %v153, %v339
        %v341 = vand.u32 %v340, 4294901760
        %342 = vmatpush.msra.mxu0 %v341
        %v343 = vand.u32 %v152, 4294901760
        %v344 = vsub.f32 %v152, %v343
        %v345 = vand.u32 %v344, 4294901760
        %346 = vmatpush.msra.mxu0 %v345
        %v347 = vand.u32 %v151, 4294901760
        %v348 = vsub.f32 %v151, %v347
        %v349 = vand.u32 %v348, 4294901760
        %350 = vmatpush.msra.mxu0 %v349
        %v351 = vand.u32 %v150, 4294901760
        %v352 = vsub.f32 %v150, %v351
        %v353 = vand.u32 %v352, 4294901760
        %354 = vmatpush.msra.mxu0 %v353
        %v355 = vand.u32 %v149, 4294901760
        %v356 = vsub.f32 %v149, %v355
        %v357 = vand.u32 %v356, 4294901760
        %358 = vmatpush.msra.mxu0 %v357
        %v359 = vand.u32 %v148, 4294901760
        %v360 = vsub.f32 %v148, %v359
        %v361 = vand.u32 %v360, 4294901760
        %362 = vmatpush.msra.mxu0 %v361
        %v363 = vand.u32 %v158, 4294901760
        %364 = vmatmul.f32.gmra.mxu0 %v363
        %v365 = vpop.f32.mrf.mxu0
        %v366 = vadd.f32 %v321, %v365
        %367 = vdwg.mxu0
        %368 = vmatpush.msra.mxu0 0.0
        %369 = vmatpush.msra.mxu0 0.0
        %370 = vmatpush.msra.mxu0 0.0
        %371 = vmatpush.msra.mxu0 0.0
        %372 = vmatpush.msra.mxu0 0.0
        %373 = vmatpush.msra.mxu0 0.0
        %374 = vmatpush.msra.mxu0 0.0
        %375 = vmatpush.msra.mxu0 0.0
        %v376 = vand.u32 %v155, 4294901760
        %377 = vmatpush.msra.mxu0 %v376
        %v378 = vand.u32 %v154, 4294901760
        %379 = vmatpush.msra.mxu0 %v378
        %v380 = vand.u32 %v153, 4294901760
        %381 = vmatpush.msra.mxu0 %v380
        %v382 = vand.u32 %v152, 4294901760
        %383 = vmatpush.msra.mxu0 %v382
        %v384 = vand.u32 %v151, 4294901760
        %385 = vmatpush.msra.mxu0 %v384
        %v386 = vand.u32 %v150, 4294901760
        %387 = vmatpush.msra.mxu0 %v386
        %v388 = vand.u32 %v149, 4294901760
        %389 = vmatpush.msra.mxu0 %v388
        %v390 = vand.u32 %v148, 4294901760
        %391 = vmatpush.msra.mxu0 %v390
        %v392 = vand.u32 %v158, 4294901760
        %393 = vmatmul.f32.gmra.mxu0 %v392
        %v394 = vpop.f32.mrf.mxu0
        %v395 = vadd.f32 %v366, %v394
        %396 = vdwg.mxu0
        %v397 = vmul.f32 %v395, %v395
        %vm398 = vcmask 261120
        %v399 = vsel %vm398, %v397, 0.0
        %400 = vadd.xlane.f32.xlu0 %v399
        %v401 = vpop.xlane.xlu0 %400
        %v402 = vrsqrt.pop %v401
        %v403 = vmul.f32 %v402, %v401
        %v404 = vmul.f32 %v403, %v402
        %v405 = vmul.f32 0.5, %v404
        %v406 = vsub.f32 1.5, %v405
        %v407 = vmul.f32 %v402, %v406
        %v408 = vmul.f32 %v401, %v407
        %vm409 = vcmp.eq.f32.partialorder %v401, inf
        %v410 = vsel %vm409, %v401, %v408
        %vm411 = vcmp.eq.f32.partialorder %v401, 0.0
        %v412 = vand.u32 %v401, 2147483648
        %v413 = vsel %vm411, %v412, %v410
        %vm414 = vcmp.gt.f32.partialorder %v413, 1.0
        %v415 = vadd.f32 %v413, 1e-07
        %v416 = vrcp.pop %v415
        %v417 = vmul.f32 %v415, %v416
        %v418 = vsub.f32 1.0, %v417
        %v419 = vmul.f32 %v416, %v418
        %v420 = vadd.f32 %v416, %v419
        %vm421 = vweird.f32 %v415
        %vm422 = vweird.f32 %v416
        %vm423 = vmor %vm421, %vm422
        %v424 = vsel %vm423, %v416, %v420
        %v425 = vand.u32 2147483647, %v415
        %vm426 = vcmp.eq.f32.partialorder %v425, 8.507059e+37
        %v427 = vand.u32 %v415, 2147483648
        %v428 = vor.u32 1.1754944e-38, %v427
        %v429 = vsel %vm426, %v428, %v424
        %v430 = vmul.f32 1.0, %v429
        %v431 = vsel %vm414, %v430, 1.0
        %v432 = vmul.f32 %v395, %v431
        %433 = vst.msk [vmem:[%s134] sm:$0xff] %vm398, %v432
        %s434 = sand.u32 %s71, 1
        %s435 = scalar_lea.sflag [#allocation3], %s434
        %s436 = sand.u32 %s71, 1
        %s437 = smul.addr %s436, 8
        %s438 = scalar_lea.vmem [#allocation2], %s437
        // Predicated region
        $region29: #{tpu_custom_call.1} parent=27 // pred_check
          %p439 = pneg %p81
        $region30: #{tpu_custom_call.1} parent=27 // pred_check_branch
          %441 = sbr.rel (%p439) target = $region32
        $region31: #{tpu_custom_call.1} parent=27 // pred_region
          %443 = vsyncadd %s435, 0
          %s444 = smul.addr %s16, 8
          %s445 = scalar_lea.hbm %s2, %s444
          %s447 = sshll.u32 %s438, 4
          %s448 = int_to_ptr.vmem [resolvable:$true] %s447
          %s449 = sshll.u32 %s445, 4
          %s450 = int_to_ptr.hbm [resolvable:$true] %s449
          %452 = dma.vmem_to_hbm [thread:$0]  %s448, 128, %s450, %s435
        $region32: #{tpu_custom_call.1} parent=27 // pred_fallthru
          _
      $region28: #{tpu_custom_call.1} parent=5 // pred_fallthru
        _
      %p453 = scmp.le.s32.totalorder 2, %s11
      // Predicated region
      $region33: #{tpu_custom_call.1} parent=5 // pred_check
        %p454 = pneg %p453
      $region34: #{tpu_custom_call.1} parent=5 // pred_check_branch
        %456 = sbr.rel (%p454) target = $region36
      $region35: #{tpu_custom_call.1} parent=5 // pred_region
        %s457 = ssub.s32 %s11, 2
        // Predicated region
        $region37: #{tpu_custom_call.1} parent=35 // pred_check
          %p458 = pneg %p87
        $region38: #{tpu_custom_call.1} parent=35 // pred_check_branch
          %460 = sbr.rel (%p458) target = $region40
        $region39: #{tpu_custom_call.1} parent=35 // pred_region
          %s461 = sand.u32 %s72, 1
          %s462 = scalar_lea.sflag [#allocation3], %s461
          %s463 = sand.u32 %s72, 1
          %s464 = smul.addr %s463, 8
          %s465 = scalar_lea.vmem [#allocation2], %s464
          %467 = dma.done %s462, 128
        $region40: #{tpu_custom_call.1} parent=35 // pred_fallthru
          _
      $region36: #{tpu_custom_call.1} parent=5 // pred_fallthru
        _
    $region6: #{tpu_custom_call.1} parent=1 // loop_footer
      %s15 = sadd.s32 1, %s11
    $region7: #{tpu_custom_call.1} parent=1 // loop_footer_branch
      %10 = sbr.rel target = $region3
    $region8: #{tpu_custom_call.1} parent=1 // loop_exit
      _
    %468 = vsyncpa [#allocation3], 1
    %s469 = scalar_lea.sflag [#allocation3], 1
    %470 = vsyncpa %s469, 1

</llo_original>
